<compile_context>
chip_gen: v7x
topology: tpu7x:2x2x1
jax: 0.10.0
libtpu: 0.0.40
codegen_flags: <defaults>
</compile_context>

<pallas_src>
import jax
import jax.numpy as jnp
import numpy as np
from jax import lax
from jax.experimental import pallas as pl
from jax.experimental.pallas import tpu as pltpu

EPS = 1e-5
LANE = 128


def _round_up(v, m):
    return (v + m - 1) // m * m


def _vmem_limit_bytes():
    """Generation-aware VMEM cap (leave headroom for Mosaic internal scratch)."""
    try:
        info = pltpu.get_tpu_info()
        cap = getattr(info, "vmem_capacity_bytes", None)
        if cap:
            return int(cap) * 3 // 4
    except Exception:
        pass
    return None


_VMEM_LIMIT = _vmem_limit_bytes()


# ---------------------------------------------------------------------------
# Pass 1: per-channel sum / sum-of-squares, accumulated across the batch grid.
# x and skip are reduced separately (no lane-axis concat); reductions ride the
# MXU as ones-row matmuls instead of XLU sublane sums.
# ---------------------------------------------------------------------------
def _bn_stats_kernel(x_ref, skip_ref, sx_ref, ss_ref):
    H, W = x_ref.shape[1], x_ref.shape[2]
    Cx, Cs = x_ref.shape[3], skip_ref.shape[3]
    ones = jnp.ones((1, H * W), jnp.float32)

    def sums(a2d):
        s = jnp.dot(ones, a2d, preferred_element_type=jnp.float32)
        sq = jnp.dot(ones, a2d * a2d, preferred_element_type=jnp.float32)
        return jnp.concatenate([s, sq], axis=0)          # (2, C)

    x2d = x_ref[0].astype(jnp.float32).reshape(H * W, Cx)
    s2d = skip_ref[0].astype(jnp.float32).reshape(H * W, Cs)

    @pl.when(pl.program_id(0) == 0)
    def _():
        sx_ref[...] = jnp.zeros_like(sx_ref)
        ss_ref[...] = jnp.zeros_like(ss_ref)

    sx_ref[...] += sums(x2d)
    ss_ref[...] += sums(s2d)


# ---------------------------------------------------------------------------
# Pass 2: normalize + conv1 + swish + conv2 + (separate) 1x1 shortcut per image.
# ---------------------------------------------------------------------------
def _conv3x3_taps(a, w_ref):
    """3x3 'same' conv as 9 accumulating MXU matmuls (no im2col materialization).

    a:     (H, W, C) bf16 activation.
    w_ref: (9*C, Cp) weight ref, rows ordered tap-major (dh, dw, cin).
    Returns an f32 (H*W, Cp) accumulator.
    """
    H, W, C = a.shape
    cp = w_ref.shape[1]
    zr = jnp.zeros((1, W, C), a.dtype)
    ap = jnp.concatenate([zr, a, zr], axis=0)            # halo rows only
    zc = jnp.zeros((H + 2, 1, C), a.dtype)
    ap = jnp.concatenate([zc, ap, zc], axis=1)           # halo cols -> (H+2, W+2, C)
    acc = jnp.zeros((H * W, cp), jnp.float32)
    for tap in range(9):
        dh, dw = tap // 3, tap % 3
        lhs = ap[dh:dh + H, dw:dw + W, :].reshape(H * W, C)
        acc = acc + jnp.dot(lhs, w_ref[tap * C:(tap + 1) * C, :],
                            preferred_element_type=jnp.float32)
    return acc


def _resblock_kernel(x_ref, skip_ref, bnx_ref, bns_ref,
                     w1x_ref, w1s_ref, b1_ref,
                     wscx_ref, wscs_ref, bsc_ref,
                     w2_ref, b2_ref, out_ref):
    H, W = x_ref.shape[1], x_ref.shape[2]
    Cx, Cs = x_ref.shape[3], skip_ref.shape[3]
    Cp = out_ref.shape[3]                 # padded out channels (multiple of 128)

    x = x_ref[0]                          # (H, W, Cx) f32
    sk = skip_ref[0]                      # (H, W, Cs) f32

    # ---- 1x1 shortcut on the RAW (pre-BN) inputs; K split over x / skip so the
    #      channel concat never materializes.  Un-fused from conv1 (1/9 the K).
    x2d = x.reshape(H * W, Cx).astype(jnp.bfloat16)
    sk2d = sk.reshape(H * W, Cs).astype(jnp.bfloat16)
    residual = (jnp.dot(x2d, wscx_ref[...], preferred_element_type=jnp.float32)
                + jnp.dot(sk2d, wscs_ref[...], preferred_element_type=jnp.float32)
                + bsc_ref[...])

    # ---- BatchNorm2d(affine=False), training mode: normalize each part with the
    #      global batch stats from pass 1 (no lane-axis concat).
    xn = ((x - bnx_ref[0:1, :].reshape(1, 1, Cx))
          * bnx_ref[1:2, :].reshape(1, 1, Cx)).astype(jnp.bfloat16)
    skn = ((sk - bns_ref[0:1, :].reshape(1, 1, Cs))
           * bns_ref[1:2, :].reshape(1, 1, Cs)).astype(jnp.bfloat16)

    # ---- conv1 (3x3, pad 1): tap accumulation, contraction split over x / skip.
    h1 = _conv3x3_taps(xn, w1x_ref)
    h1 = h1 + _conv3x3_taps(skn, w1s_ref)
    h1 = h1 + b1_ref[...]

    h1 = h1 * jax.nn.sigmoid(h1)                          # swish (EUP)

    # ---- conv2 (3x3, pad 1).
    # TODO(synk): when Cout << 128 the Cp padding of conv2's K dim wastes MXU
    # work; slice h1 back to Cout (or pack images into M) for tiny-channel nets.
    out2 = _conv3x3_taps(h1.astype(jnp.bfloat16).reshape(H, W, Cp), w2_ref)
    out2 = out2 + b2_ref[...]

    out_ref[0] = (out2 + residual).reshape(H, W, Cp).astype(out_ref.dtype)


# ---------------------------------------------------------------------------
# One-time static parameter preparation (hoisted out of the forward pass).
# ---------------------------------------------------------------------------
def prepare_kernel_params(params, cx):
    """Pad weights to lane-dense Cp, cast to bf16, lay out tap-major; batch-free."""
    w1 = params["w1_hwio"]                                # (3, 3, Cin, Cout)
    cin, cout = w1.shape[2], w1.shape[3]
    cs = cin - cx
    cp = _round_up(cout, LANE)
    padn = lambda a: jnp.pad(a, ((0, 0), (0, cp - cout)))

    # conv1: tap-major rows, split into x-channel and skip-channel halves.
    w1x = padn(w1[:, :, :cx, :].reshape(9 * cx, cout)).astype(jnp.bfloat16)
    w1s = padn(w1[:, :, cx:, :].reshape(9 * cs, cout)).astype(jnp.bfloat16)
    b1 = padn(params["b1_vec"][None, :])

    # conv2: pad both K (input) and N (output) channel dims to Cp.
    w2 = params["w2_hwio"]                                # (3, 3, Cout, Cout)
    w2 = jnp.pad(w2, ((0, 0), (0, 0), (0, cp - cout), (0, cp - cout)))
    w2 = w2.reshape(9 * cp, cp).astype(jnp.bfloat16)
    b2 = padn(params["b2_vec"][None, :])

    # 1x1 shortcut (acts on the raw concatenated input), split into x / skip rows.
    if params.get("w_sc") is not None:                    # conv shortcut
        w_sc, b_sc = params["w_sc"], params["b_sc_vec"]   # (Cin, Cout), (Cout,)
    else:                                                 # Identity shortcut
        assert cin == cout, "Identity shortcut requires in_channels == out_channels"
        w_sc = jnp.eye(cin, dtype=jnp.float32)
        b_sc = jnp.zeros((cout,), jnp.float32)
    wscx = padn(w_sc[:cx, :]).astype(jnp.bfloat16)
    wscs = padn(w_sc[cx:, :]).astype(jnp.bfloat16)
    bsc = padn(b_sc[None, :])

    return dict(cx=cx, cs=cs, cout=cout, cp=cp,
                w1x=w1x, w1s=w1s, b1=b1, w2=w2, b2=b2,
                wscx=wscx, wscs=wscs, bsc=bsc)


# ---------------------------------------------------------------------------
# JAX wrapper.
# ---------------------------------------------------------------------------
def _resblock_forward(x_nhwc, skip_nhwc, kp):
    N, H, W, Cx = x_nhwc.shape
    Cs = skip_nhwc.shape[-1]
    Cp, Cout = kp["cp"], kp["cout"]
    assert Cx == kp["cx"] and Cs == kp["cs"]

    # ---- pass 1: global batch statistics (x and skip reduced separately) ----
    stats_x, stats_s = pl.pallas_call(
        _bn_stats_kernel,
        out_shape=(jax.ShapeDtypeStruct((2, Cx), jnp.float32),
                   jax.ShapeDtypeStruct((2, Cs), jnp.float32)),
        grid=(N,),
        in_specs=[pl.BlockSpec((1, H, W, Cx), lambda n: (n, 0, 0, 0)),
                  pl.BlockSpec((1, H, W, Cs), lambda n: (n, 0, 0, 0))],
        out_specs=(pl.BlockSpec((2, Cx), lambda n: (0, 0)),
                   pl.BlockSpec((2, Cs), lambda n: (0, 0))),
        compiler_params=pltpu.CompilerParams(dimension_semantics=("arbitrary",)),
    )(x_nhwc, skip_nhwc)

    cnt = jnp.float32(N * H * W)

    def finalize(st):
        mean = st[0] / cnt
        # TODO(synk): E[x^2]-E[x]^2 in f32 can lose precision for huge N*H*W;
        # switch to a two-pass / Welford formulation if that ever matters.
        var = jnp.maximum(st[1] / cnt - mean * mean, 0.0)  # biased batch variance
        return jnp.stack([mean, lax.rsqrt(var + EPS)], axis=0)

    bn_x = finalize(stats_x)                    # (2, Cx): mean, 1/std
    bn_s = finalize(stats_s)                    # (2, Cs)
    # TODO(synk): running_mean/running_var buffer updates (training-mode module
    # state) are not reproduced; they do not affect the forward output.

    Cin = Cx + Cs
    flops = 2 * N * H * W * (9 * Cin * Cp + 9 * Cp * Cp + Cin * Cp)
    bytes_accessed = (4 * (x_nhwc.size + skip_nhwc.size)
                      + 2 * (kp["w1x"].size + kp["w1s"].size + kp["w2"].size
                             + kp["wscx"].size + kp["wscs"].size)
                      + 4 * N * H * W * Cp)
    cost = pl.CostEstimate(flops=flops, transcendentals=N * H * W * Cp,
                           bytes_accessed=bytes_accessed)

    def build_pass2(invariant_mode):
        def inv_spec(shape):
            kwargs = {} if invariant_mode is None else {"pipeline_mode": invariant_mode}
            return pl.BlockSpec(shape, lambda n: (0,) * len(shape), **kwargs)

        cparams = dict(dimension_semantics=("parallel",))  # batch split over TCs
        if _VMEM_LIMIT is not None:
            cparams["vmem_limit_bytes"] = _VMEM_LIMIT

        return pl.pallas_call(
            _resblock_kernel,
            out_shape=jax.ShapeDtypeStruct((N, H, W, Cp), jnp.float32),
            grid=(N,),
            in_specs=[
                pl.BlockSpec((1, H, W, Cx), lambda n: (n, 0, 0, 0)),
                pl.BlockSpec((1, H, W, Cs), lambda n: (n, 0, 0, 0)),
                inv_spec((2, Cx)), inv_spec((2, Cs)),
                inv_spec((9 * Cx, Cp)), inv_spec((9 * Cs, Cp)), inv_spec((1, Cp)),
                inv_spec((Cx, Cp)), inv_spec((Cs, Cp)), inv_spec((1, Cp)),
                inv_spec((9 * Cp, Cp)), inv_spec((1, Cp)),
            ],
            out_specs=pl.BlockSpec((1, H, W, Cp), lambda n: (n, 0, 0, 0)),
            compiler_params=pltpu.CompilerParams(**cparams),
            cost_estimate=cost,
        )

    args = (x_nhwc, skip_nhwc, bn_x, bn_s, kp["w1x"], kp["w1s"], kp["b1"],
            kp["wscx"], kp["wscs"], kp["bsc"], kp["w2"], kp["b2"])
    try:
        # grid-invariant operands single-buffered (their index_map is constant)
        out_pad = build_pass2(pl.Buffered(1))(*args)
    except Exception:
        out_pad = build_pass2(None)(*args)      # fallback: default double-buffering

    return out_pad[..., :Cout]


def residual_block_for_up_blocks(x_and_skips, kernel_params):
    """Mirrors ResidualBlockForUpBlocks.forward: ((x, skips)) -> (out, skips)."""
    x, skips = x_and_skips
    skips = list(skips)
    skip = skips.pop()
    # NCHW (PyTorch) -> NHWC so channels ride the 128-lane axis.
    # TODO(synk): if the surrounding model is NHWC end-to-end, these transposes
    # (and the f32 output) are removable HBM round trips (bf16 out also fine).
    x_nhwc = jnp.transpose(x, (0, 2, 3, 1))
    skip_nhwc = jnp.transpose(skip, (0, 2, 3, 1))
    out_nhwc = _resblock_forward(x_nhwc, skip_nhwc, kernel_params)
    return jnp.transpose(out_nhwc, (0, 3, 1, 2)), skips


# ---------------------------------------------------------------------------
# Parameters + pure-JAX reference.
# ---------------------------------------------------------------------------
def init_params(key, in_channels, out_channels):
    ks = jax.random.split(key, 6)
    scale = 0.05
    # PyTorch Conv2d weight layout: (Cout, Cin, kh, kw)
    w_sc_oihw = scale * jax.random.normal(ks[0], (out_channels, in_channels, 1, 1), jnp.float32)
    b_sc = scale * jax.random.normal(ks[1], (out_channels,), jnp.float32)
    w1_oihw = scale * jax.random.normal(ks[2], (out_channels, in_channels, 3, 3), jnp.float32)
    b1 = scale * jax.random.normal(ks[3], (out_channels,), jnp.float32)
    w2_oihw = scale * jax.random.normal(ks[4], (out_channels, out_channels, 3, 3), jnp.float32)
    b2 = scale * jax.random.normal(ks[5], (out_channels,), jnp.float32)
    return dict(
        # reference (PyTorch-layout) copies
        w_sc_oihw=w_sc_oihw, b_sc_vec=b_sc, w1_oihw=w1_oihw, b1_vec=b1,
        w2_oihw=w2_oihw, b2_vec=b2,
        # kernel-friendly layouts
        w_sc=jnp.transpose(w_sc_oihw[:, :, 0, 0], (1, 0)),    # (Cin, Cout)
        w1_hwio=jnp.transpose(w1_oihw, (2, 3, 1, 0)),         # (3, 3, Cin, Cout)
        w2_hwio=jnp.transpose(w2_oihw, (2, 3, 1, 0)),         # (3, 3, Cout, Cout)
    )


def reference_forward(x_and_skips, params):
    """Pure-JAX (lax.conv) reference mirroring the PyTorch module."""
    x, skips = x_and_skips
    skips = list(skips)
    skip = skips.pop()
    xc = jnp.concatenate([x, skip], axis=1)
    dn = ('NCHW', 'OIHW', 'NCHW')
    residual = lax.conv_general_dilated(xc, params["w_sc_oihw"], (1, 1), 'VALID',
                                        dimension_numbers=dn)
    residual = residual + params["b_sc_vec"][None, :, None, None]
    mean = jnp.mean(xc, axis=(0, 2, 3), keepdims=True)
    var = jnp.mean((xc - mean) ** 2, axis=(0, 2, 3), keepdims=True)
    xn = (xc - mean) / jnp.sqrt(var + EPS)
    h = lax.conv_general_dilated(xn, params["w1_oihw"], (1, 1), ((1, 1), (1, 1)),
                                 dimension_numbers=dn)
    h = h + params["b1_vec"][None, :, None, None]
    h = h * jax.nn.sigmoid(h)
    h = lax.conv_general_dilated(h, params["w2_oihw"], (1, 1), ((1, 1), (1, 1)),
                                 dimension_numbers=dn)
    h = h + params["b2_vec"][None, :, None, None]
    return h + residual, skips


if __name__ == "__main__":
    key = jax.random.PRNGKey(0)
    kx, ks_lo, ks_hi, kparm = jax.random.split(key, 4)

    N, Cx, H, W = 2, 4, 16, 16
    Cskip = 4
    in_channels = Cx + Cskip       # 8 after channel concat
    out_channels = 16              # != in_channels -> exercises the 1x1 shortcut

    x = jax.random.normal(kx, (N, Cx, H, W), jnp.float32)
    skips = [
        jax.random.normal(ks_lo, (N, Cskip, H // 2, W // 2), jnp.float32),  # stays
        jax.random.normal(ks_hi, (N, Cskip, H, W), jnp.float32),            # popped
    ]
    params = init_params(kparm, in_channels, out_channels)
    kparams = prepare_kernel_params(params, cx=Cx)   # one-time static weight prep

    out, remaining_skips = residual_block_for_up_blocks((x, skips), kparams)
    out = jax.block_until_ready(out)

    assert out.shape == (N, out_channels, H, W), out.shape
    assert len(remaining_skips) == 1

    ref_out, _ = reference_forward((x, skips), params)
    np.testing.assert_allclose(np.asarray(out), np.asarray(ref_out),
                               rtol=5e-2, atol=5e-2)

    print("KERNEL_OK")
</pallas_src>

<mosaic_0001>
module attributes {stable_mosaic.version = 11 : i64} {
  func.func @_bn_stats_kernel(%arg0: i32, %arg1: memref<1x16x16x4xf32, #tpu.memory_space<vmem>>, %arg2: memref<1x16x16x4xf32, #tpu.memory_space<vmem>>, %arg3: memref<2x4xf32, #tpu.memory_space<vmem>>, %arg4: memref<2x4xf32, #tpu.memory_space<vmem>>) attributes {dimension_semantics = [#tpu.dimension_semantics<arbitrary>], iteration_bounds = array<i64: 2>, scalar_prefetch = 0 : i64, scratch_operands = 0 : i64, tpu.core_type = #tpu.core_type<tc>, window_params = [{transform_indices = @transform_0, window_bounds = array<i64: 1, 16, 16, 4>}, {transform_indices = @transform_1, window_bounds = array<i64: 1, 16, 16, 4>}, {pipeline_mode = #tpu.pipeline_mode<synchronous>, transform_indices = @transform_2, window_bounds = array<i64: 2, 4>}, {pipeline_mode = #tpu.pipeline_mode<synchronous>, transform_indices = @transform_3, window_bounds = array<i64: 2, 4>}]} {
    %cst = arith.constant 1.000000e+00 : f32
    %0 = vector.broadcast %cst : f32 to vector<1x256xf32>
    %c0 = arith.constant 0 : index
    %c0_0 = arith.constant 0 : index
    %c0_1 = arith.constant 0 : index
    %c0_2 = arith.constant 0 : index
    %1 = vector.load %arg1[%c0, %c0_0, %c0_1, %c0_2] : memref<1x16x16x4xf32, #tpu.memory_space<vmem>>, vector<1x16x16x4xf32>
    %2 = vector.shape_cast %1 : vector<1x16x16x4xf32> to vector<16x16x4xf32>
    %3 = vector.shape_cast %2 : vector<16x16x4xf32> to vector<256x4xf32>
    %c0_3 = arith.constant 0 : index
    %c0_4 = arith.constant 0 : index
    %c0_5 = arith.constant 0 : index
    %c0_6 = arith.constant 0 : index
    %4 = vector.load %arg2[%c0_3, %c0_4, %c0_5, %c0_6] : memref<1x16x16x4xf32, #tpu.memory_space<vmem>>, vector<1x16x16x4xf32>
    %5 = vector.shape_cast %4 : vector<1x16x16x4xf32> to vector<16x16x4xf32>
    %6 = vector.shape_cast %5 : vector<16x16x4xf32> to vector<256x4xf32>
    %c0_i32 = arith.constant 0 : i32
    %7 = arith.cmpi eq, %arg0, %c0_i32 : i32
    %8 = arith.extui %7 : i1 to i32
    %c0_i32_7 = arith.constant 0 : i32
    %9 = arith.cmpi ne, %8, %c0_i32_7 : i32
    scf.if %9 {
      %cst_20 = arith.constant 0.000000e+00 : f32
      %24 = vector.broadcast %cst_20 : f32 to vector<2x4xf32>
      %c0_21 = arith.constant 0 : index
      %c0_22 = arith.constant 0 : index
      %25 = vector.load %arg3[%c0_21, %c0_22] : memref<2x4xf32, #tpu.memory_space<vmem>>, vector<2x4xf32>
      tpu.vector_store %arg3[%c0_21, %c0_22], %24 {strides = array<i32>} : memref<2x4xf32, #tpu.memory_space<vmem>>, vector<2x4xf32>,
      %cst_23 = arith.constant 0.000000e+00 : f32
      %26 = vector.broadcast %cst_23 : f32 to vector<2x4xf32>
      %c0_24 = arith.constant 0 : index
      %c0_25 = arith.constant 0 : index
      %27 = vector.load %arg4[%c0_24, %c0_25] : memref<2x4xf32, #tpu.memory_space<vmem>>, vector<2x4xf32>
      tpu.vector_store %arg4[%c0_24, %c0_25], %26 {strides = array<i32>} : memref<2x4xf32, #tpu.memory_space<vmem>>, vector<2x4xf32>,
    } else {
    }
    %c0_8 = arith.constant 0 : index
    %c0_9 = arith.constant 0 : index
    %10 = vector.load %arg3[%c0_8, %c0_9] : memref<2x4xf32, #tpu.memory_space<vmem>>, vector<2x4xf32>
    %cst_10 = arith.constant dense<0.000000e+00> : vector<1x4xf32>
    %11 = tpu.matmul %0, %3, %cst_10 {dimension_numbers = #tpu.dot_dimension_numbers<[1], [0], [0], [1], [0, 0, 1, 1], [], []>} : vector<1x256xf32>, vector<256x4xf32>, vector<1x4xf32> -> vector<1x4xf32>
    %12 = arith.mulf %3, %3 : vector<256x4xf32>
    %cst_11 = arith.constant dense<0.000000e+00> : vector<1x4xf32>
    %13 = tpu.matmul %0, %12, %cst_11 {dimension_numbers = #tpu.dot_dimension_numbers<[1], [0], [0], [1], [0, 0, 1, 1], [], []>} : vector<1x256xf32>, vector<256x4xf32>, vector<1x4xf32> -> vector<1x4xf32>
    %14 = tpu.concatenate %11, %13 in 0 : vector<1x4xf32>, vector<1x4xf32> -> vector<2x4xf32>
    %15 = arith.addf %10, %14 : vector<2x4xf32>
    %c0_12 = arith.constant 0 : index
    %c0_13 = arith.constant 0 : index
    %16 = vector.load %arg3[%c0_12, %c0_13] : memref<2x4xf32, #tpu.memory_space<vmem>>, vector<2x4xf32>
    tpu.vector_store %arg3[%c0_12, %c0_13], %15 {strides = array<i32>} : memref<2x4xf32, #tpu.memory_space<vmem>>, vector<2x4xf32>,
    %c0_14 = arith.constant 0 : index
    %c0_15 = arith.constant 0 : index
    %17 = vector.load %arg4[%c0_14, %c0_15] : memref<2x4xf32, #tpu.memory_space<vmem>>, vector<2x4xf32>
    %cst_16 = arith.constant dense<0.000000e+00> : vector<1x4xf32>
    %18 = tpu.matmul %0, %6, %cst_16 {dimension_numbers = #tpu.dot_dimension_numbers<[1], [0], [0], [1], [0, 0, 1, 1], [], []>} : vector<1x256xf32>, vector<256x4xf32>, vector<1x4xf32> -> vector<1x4xf32>
    %19 = arith.mulf %6, %6 : vector<256x4xf32>
    %cst_17 = arith.constant dense<0.000000e+00> : vector<1x4xf32>
    %20 = tpu.matmul %0, %19, %cst_17 {dimension_numbers = #tpu.dot_dimension_numbers<[1], [0], [0], [1], [0, 0, 1, 1], [], []>} : vector<1x256xf32>, vector<256x4xf32>, vector<1x4xf32> -> vector<1x4xf32>
    %21 = tpu.concatenate %18, %20 in 0 : vector<1x4xf32>, vector<1x4xf32> -> vector<2x4xf32>
    %22 = arith.addf %17, %21 : vector<2x4xf32>
    %c0_18 = arith.constant 0 : index
    %c0_19 = arith.constant 0 : index
    %23 = vector.load %arg4[%c0_18, %c0_19] : memref<2x4xf32, #tpu.memory_space<vmem>>, vector<2x4xf32>
    tpu.vector_store %arg4[%c0_18, %c0_19], %22 {strides = array<i32>} : memref<2x4xf32, #tpu.memory_space<vmem>>, vector<2x4xf32>,
    return
  }
  func.func @transform_0(%arg0: i32) -> (i32, i32, i32, i32) {
    %c0_i32 = arith.constant 0 : i32
    %c0_i32_0 = arith.constant 0 : i32
    %c0_i32_1 = arith.constant 0 : i32
    %c0_i32_2 = arith.constant 0 : i32
    return %arg0, %c0_i32, %c0_i32_0, %c0_i32_1 : i32, i32, i32, i32
  }
  func.func @transform_1(%arg0: i32) -> (i32, i32, i32, i32) {
    %c0_i32 = arith.constant 0 : i32
    %c0_i32_0 = arith.constant 0 : i32
    %c0_i32_1 = arith.constant 0 : i32
    %c0_i32_2 = arith.constant 0 : i32
    return %arg0, %c0_i32, %c0_i32_0, %c0_i32_1 : i32, i32, i32, i32
  }
  func.func @transform_2(%arg0: i32) -> (i32, i32) {
    %c0_i32 = arith.constant 0 : i32
    %c0_i32_0 = arith.constant 0 : i32
    %c0_i32_1 = arith.constant 0 : i32
    return %c0_i32, %c0_i32_0 : i32, i32
  }
  func.func @transform_3(%arg0: i32) -> (i32, i32) {
    %c0_i32 = arith.constant 0 : i32
    %c0_i32_0 = arith.constant 0 : i32
    %c0_i32_1 = arith.constant 0 : i32
    return %c0_i32, %c0_i32_0 : i32, i32
  }
}

</mosaic_0001>

<llo_original>
// kernel: tpu_custom_call.1
$region0: #{tpu_custom_call.1}
  #allocation0 [shape = 'u32[]', space=smem, size = 0x4, offset = 0x4, fixed_abs, tag = 'smem constant byte address 0x4 - core index']
  #allocation1 [shape = 'u32[144,128]{1,0:T(1,128)}', space=vmem, size = 0x12000, scoped, tag = 'internal scratch']
  %s0 = inlined_call_operand.vmem [shape: f32[2,16,16,4], index: 0, kind: input, shape index: {}]
  %s1 = inlined_call_operand.vmem [shape: f32[2,16,16,4], index: 1, kind: input, shape index: {}]
  %s2 = inlined_call_operand.hbm [shape: f32[2,4], index: 2, kind: output, shape index: {0}]
  %s3 = inlined_call_operand.hbm [shape: f32[2,4], index: 3, kind: output, shape index: {1}]
  %4 = xla_tuple %s2, %s3
  %s5 = sld [smem:[#allocation0]]
  $region53: #{tpu_custom_call.1} parent=0
    _
  %s7 = ssub.s32 1, %s5
  %s8 = scalar_select 0, %s7, %s5
  $region1: #{tpu_custom_call.1} parent=0
    #allocation2 [shape = 'u8[1024]{0}', space=vmem, size = 0x400, scoped, tag = 'output window, operand 0, single buffered']
    #allocation3 [shape = 's32[2]{0}', space=sflag, size = 0x8, scoped, tag = 'scoped memory for tpu_custom_call.1']
    #allocation4 [shape = 'u8[1024]{0}', space=vmem, size = 0x400, scoped, tag = 'output window, operand 1, single buffered']
    #allocation5 [shape = 's32[1]{0}', space=sflag, size = 0x4, scoped, tag = 'scoped memory for tpu_custom_call.1']
    %9 = vsyncpa [#allocation3], 0
    %10 = vsyncpa [#allocation5], 0
    loop: start=0, step=1, limit=4
    $region2: #{tpu_custom_call.1} parent=1 // loop_pre_header
      _
    $region3: #{tpu_custom_call.1} parent=1 // loop_header
      %s12 = sphi 0, %s16
      %p13 = scmp.ge.s32.totalorder %s12, 4
      %s22 = sphi 0, %s24
      %s25 = sphi 0, %s22
      %s26 = sphi 0, %s25
      %s42 = sphi 0, %s26
      %s48 = sphi 0, %s50
      %s51 = sphi 0, %s48
      %s52 = sphi 0, %s51
      %s68 = sphi 0, %s52
      %s72 = sphi 0, %s72
      %s74 = sphi 0, %s72
      %s75 = sphi 0, %s74
      %s89 = sphi 0, %s75
      %s93 = sphi 0, %s93
      %s95 = sphi 0, %s93
      %s96 = sphi 0, %s95
      %s110 = sphi 0, %s96
    $region4: #{tpu_custom_call.1} parent=1 // loop_header_branch
      %15 = sbr.rel (%p13) target = $region8
    $region5: #{tpu_custom_call.1} parent=1 // loop_body
      %s17 = ssub.s32 %s12, 1
      %s18 = ssub.s32 %s12, 2
      %s19 = sadd.s32 %s12, 1
      %s20 = ssub.s32 %s12, %s19
      %p21 = scmp.eq.s32.totalorder %s20, 0
      %s23 = sadd.s32 %s22, 1
      %s24 = scalar_select %p21, %s22, %s23
      %p27 = pneg %p21
      %p28 = scmp.eq.s32.totalorder %s12, 1
      %p29 = por %p27, %p28
      %p30 = scmp.ne.s32.totalorder %s22, %s25
      %p31 = scmp.eq.s32.totalorder %s12, 0
      %p32 = por %p30, %p31
      %p33 = scmp.ne.s32.totalorder %s22, %s25
      %p34 = scmp.eq.s32.totalorder %s17, 1
      %p35 = por %p33, %p34
      %p36 = scmp.ne.s32.totalorder %s25, %s26
      %p37 = scmp.eq.s32.totalorder %s17, 0
      %p38 = por %p36, %p37
      %p39 = scmp.ne.s32.totalorder %s25, %s26
      %p40 = scmp.eq.s32.totalorder %s18, 1
      %p41 = por %p39, %p40
      %p43 = scmp.ne.s32.totalorder %s26, %s42
      %p44 = scmp.eq.s32.totalorder %s18, 0
      %p45 = por %p43, %p44
      %s46 = ssub.s32 %s12, %s19
      %p47 = scmp.eq.s32.totalorder %s46, 0
      %s49 = sadd.s32 %s48, 1
      %s50 = scalar_select %p47, %s48, %s49
      %p53 = pneg %p47
      %p54 = scmp.eq.s32.totalorder %s12, 1
      %p55 = por %p53, %p54
      %p56 = scmp.ne.s32.totalorder %s48, %s51
      %p57 = scmp.eq.s32.totalorder %s12, 0
      %p58 = por %p56, %p57
      %p59 = scmp.ne.s32.totalorder %s48, %s51
      %p60 = scmp.eq.s32.totalorder %s17, 1
      %p61 = por %p59, %p60
      %p62 = scmp.ne.s32.totalorder %s51, %s52
      %p63 = scmp.eq.s32.totalorder %s17, 0
      %p64 = por %p62, %p63
      %p65 = scmp.ne.s32.totalorder %s51, %s52
      %p66 = scmp.eq.s32.totalorder %s18, 1
      %p67 = por %p65, %p66
      %p69 = scmp.ne.s32.totalorder %s52, %s68
      %p70 = scmp.eq.s32.totalorder %s18, 0
      %p71 = por %p69, %p70
      %s73 = sadd.s32 %s72, 1
      %p76 = scmp.eq.s32.totalorder %s12, 1
      %p77 = scmp.ne.s32.totalorder %s72, %s74
      %p78 = scmp.eq.s32.totalorder %s12, 0
      %p79 = por %p77, %p78
      %p80 = scmp.ne.s32.totalorder %s72, %s74
      %p81 = scmp.eq.s32.totalorder %s17, 1
      %p82 = por %p80, %p81
      %p83 = scmp.ne.s32.totalorder %s74, %s75
      %p84 = scmp.eq.s32.totalorder %s17, 0
      %p85 = por %p83, %p84
      %p86 = scmp.ne.s32.totalorder %s74, %s75
      %p87 = scmp.eq.s32.totalorder %s18, 1
      %p88 = por %p86, %p87
      %p90 = scmp.ne.s32.totalorder %s75, %s89
      %p91 = scmp.eq.s32.totalorder %s18, 0
      %p92 = por %p90, %p91
      %s94 = sadd.s32 %s93, 1
      %p97 = scmp.eq.s32.totalorder %s12, 1
      %p98 = scmp.ne.s32.totalorder %s93, %s95
      %p99 = scmp.eq.s32.totalorder %s12, 0
      %p100 = por %p98, %p99
      %p101 = scmp.ne.s32.totalorder %s93, %s95
      %p102 = scmp.eq.s32.totalorder %s17, 1
      %p103 = por %p101, %p102
      %p104 = scmp.ne.s32.totalorder %s95, %s96
      %p105 = scmp.eq.s32.totalorder %s17, 0
      %p106 = por %p104, %p105
      %p107 = scmp.ne.s32.totalorder %s95, %s96
      %p108 = scmp.eq.s32.totalorder %s18, 1
      %p109 = por %p107, %p108
      %p111 = scmp.ne.s32.totalorder %s96, %s110
      %p112 = scmp.eq.s32.totalorder %s18, 0
      %p113 = por %p111, %p112
      %p114 = scmp.le.s32.totalorder 1, %s12
      %p115 = scmp.lt.s32.totalorder %s12, 3
      %p116 = pnand %p114, %p115
      %p117 = pneg %p116
      // Predicated region
      $region9: #{tpu_custom_call.1} parent=5 // pred_check
        _
      $region10: #{tpu_custom_call.1} parent=5 // pred_check_branch
        %119 = sbr.rel (%p116) target = $region12
      $region11: #{tpu_custom_call.1} parent=5 // pred_region
        %s120 = ssub.s32 %s12, 1
      $region12: #{tpu_custom_call.1} parent=5 // pred_fallthru
        _
      %p121 = scmp.lt.s32.totalorder %s12, 2
      // Predicated region
      $region13: #{tpu_custom_call.1} parent=5 // pred_check
        %p122 = pneg %p121
      $region14: #{tpu_custom_call.1} parent=5 // pred_check_branch
        %124 = sbr.rel (%p122) target = $region16
      $region15: #{tpu_custom_call.1} parent=5 // pred_region
        // Predicated region
        $region17: #{tpu_custom_call.1} parent=15 // pred_check
          %p125 = pneg %p32
        $region18: #{tpu_custom_call.1} parent=15 // pred_check_branch
          %127 = sbr.rel (%p125) target = $region20
        $region19: #{tpu_custom_call.1} parent=15 // pred_region
          %p128 = scmp.lt.s32.totalorder %s12, 1
          %s129 = scalar_select %p128, %s12, 1
          %s130 = smul.addr %s129, 32
          %s131 = smul.addr %s130, 8
          %s132 = scalar_lea.vmem %s0, %s131
        $region20: #{tpu_custom_call.1} parent=15 // pred_fallthru
          _
        // Predicated region
        $region21: #{tpu_custom_call.1} parent=15 // pred_check
          %p133 = pneg %p58
        $region22: #{tpu_custom_call.1} parent=15 // pred_check_branch
          %135 = sbr.rel (%p133) target = $region24
        $region23: #{tpu_custom_call.1} parent=15 // pred_region
          %p136 = scmp.lt.s32.totalorder %s12, 1
          %s137 = scalar_select %p136, %s12, 1
          %s138 = smul.addr %s137, 32
          %s139 = smul.addr %s138, 8
          %s140 = scalar_lea.vmem %s1, %s139
        $region24: #{tpu_custom_call.1} parent=15 // pred_fallthru
          _
      $region16: #{tpu_custom_call.1} parent=5 // pred_fallthru
        _
      %p141 = scmp.le.s32.totalorder 1, %s12
      %p142 = scmp.lt.s32.totalorder %s12, 3
      %p143 = pnand %p141, %p142
      %p144 = pneg %p143
      // Predicated region
      $region25: #{tpu_custom_call.1} parent=5 // pred_check
        _
      $region26: #{tpu_custom_call.1} parent=5 // pred_check_branch
        %146 = sbr.rel (%p143) target = $region28
      $region27: #{tpu_custom_call.1} parent=5 // pred_region
        %s147 = ssub.s32 %s12, 1
        %p148 = scmp.lt.s32.totalorder %s17, 1
        %s149 = scalar_select %p148, %s17, 1
        %s150 = smul.addr %s149, 32
        %s151 = smul.addr %s150, 8
        %s152 = scalar_lea.vmem %s0, %s151
        %p153 = pneg %p38
        %p154 = pneg %p35
        %p155 = scmp.lt.s32.totalorder %s17, 1
        %s156 = scalar_select %p155, %s17, 1
        %s157 = smul.addr %s156, 32
        %s158 = smul.addr %s157, 8
        %s159 = scalar_lea.vmem %s1, %s158
        %p160 = pneg %p64
        %p161 = pneg %p61
        %p162 = pneg %p85
        %p163 = pneg %p82
        %p164 = pneg %p106
        %p165 = pneg %p103
        %p166 = scmp.lt.s32.totalorder %s17, 1
        %s167 = scalar_select %p166, %s17, 1
        %s168 = smul.addr %s167, 32
        %s169 = smul.addr %s168, 8
        %s170 = scalar_lea.vmem %s0, %s169
        %p171 = scmp.lt.s32.totalorder %s17, 1
        %s172 = scalar_select %p171, %s17, 1
        %s173 = smul.addr %s172, 32
        %s174 = smul.addr %s173, 8
        %s175 = scalar_lea.vmem %s1, %s174
        %v176 = vld [vmem:[%s170] sm:$0xff]
        %v177 = vld [vmem:[%s170 + $0x8] sm:$0xff]
        %v178 = vld [vmem:[%s170 + $0x10] sm:$0xff]
        %v179 = vld [vmem:[%s170 + $0x18] sm:$0xff]
        %v180 = vld [vmem:[%s170 + $0x20] sm:$0xff]
        %v181 = vld [vmem:[%s170 + $0x28] sm:$0xff]
        %v182 = vld [vmem:[%s170 + $0x30] sm:$0xff]
        %v183 = vld [vmem:[%s170 + $0x38] sm:$0xff]
        %v184 = vld [vmem:[%s170 + $0x40] sm:$0xff]
        %v185 = vld [vmem:[%s170 + $0x48] sm:$0xff]
        %v186 = vld [vmem:[%s170 + $0x50] sm:$0xff]
        %v187 = vld [vmem:[%s170 + $0x58] sm:$0xff]
        %v188 = vld [vmem:[%s170 + $0x60] sm:$0xff]
        %v189 = vld [vmem:[%s170 + $0x68] sm:$0xff]
        %v190 = vld [vmem:[%s170 + $0x70] sm:$0xff]
        %v191 = vld [vmem:[%s170 + $0x78] sm:$0xff]
        %v192 = vld [vmem:[%s170 + $0x80] sm:$0xff]
        %v193 = vld [vmem:[%s170 + $0x88] sm:$0xff]
        %v194 = vld [vmem:[%s170 + $0x90] sm:$0xff]
        %v195 = vld [vmem:[%s170 + $0x98] sm:$0xff]
        %v196 = vld [vmem:[%s170 + $0xa0] sm:$0xff]
        %v197 = vld [vmem:[%s170 + $0xa8] sm:$0xff]
        %v198 = vld [vmem:[%s170 + $0xb0] sm:$0xff]
        %v199 = vld [vmem:[%s170 + $0xb8] sm:$0xff]
        %v200 = vld [vmem:[%s170 + $0xc0] sm:$0xff]
        %v201 = vld [vmem:[%s170 + $0xc8] sm:$0xff]
        %v202 = vld [vmem:[%s170 + $0xd0] sm:$0xff]
        %v203 = vld [vmem:[%s170 + $0xd8] sm:$0xff]
        %v204 = vld [vmem:[%s170 + $0xe0] sm:$0xff]
        %v205 = vld [vmem:[%s170 + $0xe8] sm:$0xff]
        %v206 = vld [vmem:[%s170 + $0xf0] sm:$0xff]
        %v207 = vld [vmem:[%s170 + $0xf8] sm:$0xff]
        %v208 = vld [vmem:[%s175] sm:$0xff]
        %v209 = vld [vmem:[%s175 + $0x8] sm:$0xff]
        %v210 = vld [vmem:[%s175 + $0x10] sm:$0xff]
        %v211 = vld [vmem:[%s175 + $0x18] sm:$0xff]
        %v212 = vld [vmem:[%s175 + $0x20] sm:$0xff]
        %v213 = vld [vmem:[%s175 + $0x28] sm:$0xff]
        %v214 = vld [vmem:[%s175 + $0x30] sm:$0xff]
        %v215 = vld [vmem:[%s175 + $0x38] sm:$0xff]
        %v216 = vld [vmem:[%s175 + $0x40] sm:$0xff]
        %v217 = vld [vmem:[%s175 + $0x48] sm:$0xff]
        %v218 = vld [vmem:[%s175 + $0x50] sm:$0xff]
        %v219 = vld [vmem:[%s175 + $0x58] sm:$0xff]
        %v220 = vld [vmem:[%s175 + $0x60] sm:$0xff]
        %v221 = vld [vmem:[%s175 + $0x68] sm:$0xff]
        %v222 = vld [vmem:[%s175 + $0x70] sm:$0xff]
        %v223 = vld [vmem:[%s175 + $0x78] sm:$0xff]
        %v224 = vld [vmem:[%s175 + $0x80] sm:$0xff]
        %v225 = vld [vmem:[%s175 + $0x88] sm:$0xff]
        %v226 = vld [vmem:[%s175 + $0x90] sm:$0xff]
        %v227 = vld [vmem:[%s175 + $0x98] sm:$0xff]
        %v228 = vld [vmem:[%s175 + $0xa0] sm:$0xff]
        %v229 = vld [vmem:[%s175 + $0xa8] sm:$0xff]
        %v230 = vld [vmem:[%s175 + $0xb0] sm:$0xff]
        %v231 = vld [vmem:[%s175 + $0xb8] sm:$0xff]
        %v232 = vld [vmem:[%s175 + $0xc0] sm:$0xff]
        %v233 = vld [vmem:[%s175 + $0xc8] sm:$0xff]
        %v234 = vld [vmem:[%s175 + $0xd0] sm:$0xff]
        %v235 = vld [vmem:[%s175 + $0xd8] sm:$0xff]
        %v236 = vld [vmem:[%s175 + $0xe0] sm:$0xff]
        %v237 = vld [vmem:[%s175 + $0xe8] sm:$0xff]
        %v238 = vld [vmem:[%s175 + $0xf0] sm:$0xff]
        %v239 = vld [vmem:[%s175 + $0xf8] sm:$0xff]
        %p240 = scmp.eq.s32.totalorder %s17, 0
        // Predicated region
        $region29: #{tpu_custom_call.1} parent=27 // pred_check
          %p241 = pneg %p240
        $region30: #{tpu_custom_call.1} parent=27 // pred_check_branch
          %243 = sbr.rel (%p241) target = $region32
        $region31: #{tpu_custom_call.1} parent=27 // pred_region
          %vm244 = vcmask 25600
          %245 = vst.msk [vmem:[#allocation2] sm:$0x3] %vm244, 0.0
          %246 = vst.msk [vmem:[#allocation4] sm:$0x3] %vm244, 0.0
        $region32: #{tpu_custom_call.1} parent=27 // pred_fallthru
          _
        %v247 = vld [vmem:[#allocation2] sm:$0x3]
        %248 = vmatprep.subr.mxu0 0.0
        %249 = vmatpush1.msra.mxu0 %v176
        %250 = vmatprep.subr.mxu0 0.0
        %251 = vmatpush1.msra.mxu0 %v177
        %252 = vmatprep.subr.mxu0 0.0
        %253 = vmatpush1.msra.mxu0 %v178
        %254 = vmatprep.subr.mxu0 0.0
        %255 = vmatpush1.msra.mxu0 %v179
        %256 = vmatprep.subr.mxu0 0.0
        %257 = vmatpush1.msra.mxu0 %v180
        %258 = vmatprep.subr.mxu0 0.0
        %259 = vmatpush1.msra.mxu0 %v181
        %260 = vmatprep.subr.mxu0 0.0
        %261 = vmatpush1.msra.mxu0 %v182
        %262 = vmatprep.subr.mxu0 0.0
        %263 = vmatpush1.msra.mxu0 %v183
        %264 = vmatprep.subr.mxu0 0.0
        %265 = vmatpush1.msra.mxu0 %v184
        %266 = vmatprep.subr.mxu0 0.0
        %267 = vmatpush1.msra.mxu0 %v185
        %268 = vmatprep.subr.mxu0 0.0
        %269 = vmatpush1.msra.mxu0 %v186
        %270 = vmatprep.subr.mxu0 0.0
        %271 = vmatpush1.msra.mxu0 %v187
        %272 = vmatprep.subr.mxu0 0.0
        %273 = vmatpush1.msra.mxu0 %v188
        %274 = vmatprep.subr.mxu0 0.0
        %275 = vmatpush1.msra.mxu0 %v189
        %276 = vmatprep.subr.mxu0 0.0
        %277 = vmatpush1.msra.mxu0 %v190
        %278 = vmatprep.subr.mxu0 0.0
        %279 = vmatpush1.msra.mxu0 %v191
        %280 = vmatprep.subr.mxu0 0.0
        %281 = vmatpush1.msra.mxu0 %v192
        %282 = vmatprep.subr.mxu0 0.0
        %283 = vmatpush1.msra.mxu0 %v193
        %284 = vmatprep.subr.mxu0 0.0
        %285 = vmatpush1.msra.mxu0 %v194
        %286 = vmatprep.subr.mxu0 0.0
        %287 = vmatpush1.msra.mxu0 %v195
        %288 = vmatprep.subr.mxu0 0.0
        %289 = vmatpush1.msra.mxu0 %v196
        %290 = vmatprep.subr.mxu0 0.0
        %291 = vmatpush1.msra.mxu0 %v197
        %292 = vmatprep.subr.mxu0 0.0
        %293 = vmatpush1.msra.mxu0 %v198
        %294 = vmatprep.subr.mxu0 0.0
        %295 = vmatpush1.msra.mxu0 %v199
        %296 = vmatprep.subr.mxu0 0.0
        %297 = vmatpush1.msra.mxu0 %v200
        %298 = vmatprep.subr.mxu0 0.0
        %299 = vmatpush1.msra.mxu0 %v201
        %300 = vmatprep.subr.mxu0 0.0
        %301 = vmatpush1.msra.mxu0 %v202
        %302 = vmatprep.subr.mxu0 0.0
        %303 = vmatpush1.msra.mxu0 %v203
        %304 = vmatprep.subr.mxu0 0.0
        %305 = vmatpush1.msra.mxu0 %v204
        %306 = vmatprep.subr.mxu0 0.0
        %307 = vmatpush1.msra.mxu0 %v205
        %308 = vmatprep.subr.mxu0 0.0
        %309 = vmatpush1.msra.mxu0 %v206
        %310 = vmatprep.subr.mxu0 0.0
        %311 = vmatpush1.msra.mxu0 %v207
        %312 = vmatprep.mubr.f32.mxu0 1.0
        %313 = vmatmul.mubr.f32.gmra.mrb[0].mxu0 1.0
        %v314 = vpop.f32.mrb[0].mxu0
        %v315 = vadd.f32 0.0, %v314
        %v316 = vpop.f32.mrb[0].mxu0
        %317 = vdwg.mxu0
        %v318 = vmul.f32 %v176, %v176
        %v319 = vmul.f32 %v177, %v177
        %v320 = vmul.f32 %v178, %v178
        %v321 = vmul.f32 %v179, %v179
        %v322 = vmul.f32 %v180, %v180
        %v323 = vmul.f32 %v181, %v181
        %v324 = vmul.f32 %v182, %v182
        %v325 = vmul.f32 %v183, %v183
        %v326 = vmul.f32 %v184, %v184
        %v327 = vmul.f32 %v185, %v185
        %v328 = vmul.f32 %v186, %v186
        %v329 = vmul.f32 %v187, %v187
        %v330 = vmul.f32 %v188, %v188
        %v331 = vmul.f32 %v189, %v189
        %v332 = vmul.f32 %v190, %v190
        %v333 = vmul.f32 %v191, %v191
        %v334 = vmul.f32 %v192, %v192
        %v335 = vmul.f32 %v193, %v193
        %v336 = vmul.f32 %v194, %v194
        %v337 = vmul.f32 %v195, %v195
        %v338 = vmul.f32 %v196, %v196
        %v339 = vmul.f32 %v197, %v197
        %v340 = vmul.f32 %v198, %v198
        %v341 = vmul.f32 %v199, %v199
        %v342 = vmul.f32 %v200, %v200
        %v343 = vmul.f32 %v201, %v201
        %v344 = vmul.f32 %v202, %v202
        %v345 = vmul.f32 %v203, %v203
        %v346 = vmul.f32 %v204, %v204
        %v347 = vmul.f32 %v205, %v205
        %v348 = vmul.f32 %v206, %v206
        %v349 = vmul.f32 %v207, %v207
        %350 = vmatprep.subr.mxu0 0.0
        %351 = vmatpush1.msra.mxu0 %v318
        %352 = vmatprep.subr.mxu0 0.0
        %353 = vmatpush1.msra.mxu0 %v319
        %354 = vmatprep.subr.mxu0 0.0
        %355 = vmatpush1.msra.mxu0 %v320
        %356 = vmatprep.subr.mxu0 0.0
        %357 = vmatpush1.msra.mxu0 %v321
        %358 = vmatprep.subr.mxu0 0.0
        %359 = vmatpush1.msra.mxu0 %v322
        %360 = vmatprep.subr.mxu0 0.0
        %361 = vmatpush1.msra.mxu0 %v323
        %362 = vmatprep.subr.mxu0 0.0
        %363 = vmatpush1.msra.mxu0 %v324
        %364 = vmatprep.subr.mxu0 0.0
        %365 = vmatpush1.msra.mxu0 %v325
        %366 = vmatprep.subr.mxu0 0.0
        %367 = vmatpush1.msra.mxu0 %v326
        %368 = vmatprep.subr.mxu0 0.0
        %369 = vmatpush1.msra.mxu0 %v327
        %370 = vmatprep.subr.mxu0 0.0
        %371 = vmatpush1.msra.mxu0 %v328
        %372 = vmatprep.subr.mxu0 0.0
        %373 = vmatpush1.msra.mxu0 %v329
        %374 = vmatprep.subr.mxu0 0.0
        %375 = vmatpush1.msra.mxu0 %v330
        %376 = vmatprep.subr.mxu0 0.0
        %377 = vmatpush1.msra.mxu0 %v331
        %378 = vmatprep.subr.mxu0 0.0
        %379 = vmatpush1.msra.mxu0 %v332
        %380 = vmatprep.subr.mxu0 0.0
        %381 = vmatpush1.msra.mxu0 %v333
        %382 = vmatprep.subr.mxu0 0.0
        %383 = vmatpush1.msra.mxu0 %v334
        %384 = vmatprep.subr.mxu0 0.0
        %385 = vmatpush1.msra.mxu0 %v335
        %386 = vmatprep.subr.mxu0 0.0
        %387 = vmatpush1.msra.mxu0 %v336
        %388 = vmatprep.subr.mxu0 0.0
        %389 = vmatpush1.msra.mxu0 %v337
        %390 = vmatprep.subr.mxu0 0.0
        %391 = vmatpush1.msra.mxu0 %v338
        %392 = vmatprep.subr.mxu0 0.0
        %393 = vmatpush1.msra.mxu0 %v339
        %394 = vmatprep.subr.mxu0 0.0
        %395 = vmatpush1.msra.mxu0 %v340
        %396 = vmatprep.subr.mxu0 0.0
        %397 = vmatpush1.msra.mxu0 %v341
        %398 = vmatprep.subr.mxu0 0.0
        %399 = vmatpush1.msra.mxu0 %v342
        %400 = vmatprep.subr.mxu0 0.0
        %401 = vmatpush1.msra.mxu0 %v343
        %402 = vmatprep.subr.mxu0 0.0
        %403 = vmatpush1.msra.mxu0 %v344
        %404 = vmatprep.subr.mxu0 0.0
        %405 = vmatpush1.msra.mxu0 %v345
        %406 = vmatprep.subr.mxu0 0.0
        %407 = vmatpush1.msra.mxu0 %v346
        %408 = vmatprep.subr.mxu0 0.0
        %409 = vmatpush1.msra.mxu0 %v347
        %410 = vmatprep.subr.mxu0 0.0
        %411 = vmatpush1.msra.mxu0 %v348
        %412 = vmatprep.subr.mxu0 0.0
        %413 = vmatpush1.msra.mxu0 %v349
        %414 = vmatprep.mubr.f32.mxu0 1.0
        %415 = vmatmul.mubr.f32.gmra.mrb[0].mxu0 1.0
        %v416 = vpop.f32.mrb[0].mxu0
        %v417 = vadd.f32 0.0, %v416
        %v418 = vpop.f32.mrb[0].mxu0
        %419 = vdwg.mxu0
        %v421 = vrot.slane %v417, 7
        %vm423 = vcmask 1040384
        %v424 = vsel %vm423, %v315, %v421
        %v425 = vadd.f32 %v247, %v424
        %vm426 = vcmask 25600
        %427 = vst.msk [vmem:[#allocation2] sm:$0x3] %vm426, %v425
        %v428 = vld [vmem:[#allocation4] sm:$0x3]
        %429 = vmatprep.subr.mxu0 0.0
        %430 = vmatpush1.msra.mxu0 %v208
        %431 = vmatprep.subr.mxu0 0.0
        %432 = vmatpush1.msra.mxu0 %v209
        %433 = vmatprep.subr.mxu0 0.0
        %434 = vmatpush1.msra.mxu0 %v210
        %435 = vmatprep.subr.mxu0 0.0
        %436 = vmatpush1.msra.mxu0 %v211
        %437 = vmatprep.subr.mxu0 0.0
        %438 = vmatpush1.msra.mxu0 %v212
        %439 = vmatprep.subr.mxu0 0.0
        %440 = vmatpush1.msra.mxu0 %v213
        %441 = vmatprep.subr.mxu0 0.0
        %442 = vmatpush1.msra.mxu0 %v214
        %443 = vmatprep.subr.mxu0 0.0
        %444 = vmatpush1.msra.mxu0 %v215
        %445 = vmatprep.subr.mxu0 0.0
        %446 = vmatpush1.msra.mxu0 %v216
        %447 = vmatprep.subr.mxu0 0.0
        %448 = vmatpush1.msra.mxu0 %v217
        %449 = vmatprep.subr.mxu0 0.0
        %450 = vmatpush1.msra.mxu0 %v218
        %451 = vmatprep.subr.mxu0 0.0
        %452 = vmatpush1.msra.mxu0 %v219
        %453 = vmatprep.subr.mxu0 0.0
        %454 = vmatpush1.msra.mxu0 %v220
        %455 = vmatprep.subr.mxu0 0.0
        %456 = vmatpush1.msra.mxu0 %v221
        %457 = vmatprep.subr.mxu0 0.0
        %458 = vmatpush1.msra.mxu0 %v222
        %459 = vmatprep.subr.mxu0 0.0
        %460 = vmatpush1.msra.mxu0 %v223
        %461 = vmatprep.subr.mxu0 0.0
        %462 = vmatpush1.msra.mxu0 %v224
        %463 = vmatprep.subr.mxu0 0.0
        %464 = vmatpush1.msra.mxu0 %v225
        %465 = vmatprep.subr.mxu0 0.0
        %466 = vmatpush1.msra.mxu0 %v226
        %467 = vmatprep.subr.mxu0 0.0
        %468 = vmatpush1.msra.mxu0 %v227
        %469 = vmatprep.subr.mxu0 0.0
        %470 = vmatpush1.msra.mxu0 %v228
        %471 = vmatprep.subr.mxu0 0.0
        %472 = vmatpush1.msra.mxu0 %v229
        %473 = vmatprep.subr.mxu0 0.0
        %474 = vmatpush1.msra.mxu0 %v230
        %475 = vmatprep.subr.mxu0 0.0
        %476 = vmatpush1.msra.mxu0 %v231
        %477 = vmatprep.subr.mxu0 0.0
        %478 = vmatpush1.msra.mxu0 %v232
        %479 = vmatprep.subr.mxu0 0.0
        %480 = vmatpush1.msra.mxu0 %v233
        %481 = vmatprep.subr.mxu0 0.0
        %482 = vmatpush1.msra.mxu0 %v234
        %483 = vmatprep.subr.mxu0 0.0
        %484 = vmatpush1.msra.mxu0 %v235
        %485 = vmatprep.subr.mxu0 0.0
        %486 = vmatpush1.msra.mxu0 %v236
        %487 = vmatprep.subr.mxu0 0.0
        %488 = vmatpush1.msra.mxu0 %v237
        %489 = vmatprep.subr.mxu0 0.0
        %490 = vmatpush1.msra.mxu0 %v238
        %491 = vmatprep.subr.mxu0 0.0
        %492 = vmatpush1.msra.mxu0 %v239
        %493 = vmatprep.mubr.f32.mxu0 1.0
        %494 = vmatmul.mubr.f32.gmra.mrb[0].mxu0 1.0
        %v495 = vpop.f32.mrb[0].mxu0
        %v496 = vadd.f32 0.0, %v495
        %v497 = vpop.f32.mrb[0].mxu0
        %498 = vdwg.mxu0
        %v499 = vmul.f32 %v208, %v208
        %v500 = vmul.f32 %v209, %v209
        %v501 = vmul.f32 %v210, %v210
        %v502 = vmul.f32 %v211, %v211
        %v503 = vmul.f32 %v212, %v212
        %v504 = vmul.f32 %v213, %v213
        %v505 = vmul.f32 %v214, %v214
        %v506 = vmul.f32 %v215, %v215
        %v507 = vmul.f32 %v216, %v216
        %v508 = vmul.f32 %v217, %v217
        %v509 = vmul.f32 %v218, %v218
        %v510 = vmul.f32 %v219, %v219
        %v511 = vmul.f32 %v220, %v220
        %v512 = vmul.f32 %v221, %v221
        %v513 = vmul.f32 %v222, %v222
        %v514 = vmul.f32 %v223, %v223
        %v515 = vmul.f32 %v224, %v224
        %v516 = vmul.f32 %v225, %v225
        %v517 = vmul.f32 %v226, %v226
        %v518 = vmul.f32 %v227, %v227
        %v519 = vmul.f32 %v228, %v228
        %v520 = vmul.f32 %v229, %v229
        %v521 = vmul.f32 %v230, %v230
        %v522 = vmul.f32 %v231, %v231
        %v523 = vmul.f32 %v232, %v232
        %v524 = vmul.f32 %v233, %v233
        %v525 = vmul.f32 %v234, %v234
        %v526 = vmul.f32 %v235, %v235
        %v527 = vmul.f32 %v236, %v236
        %v528 = vmul.f32 %v237, %v237
        %v529 = vmul.f32 %v238, %v238
        %v530 = vmul.f32 %v239, %v239
        %531 = vmatprep.subr.mxu0 0.0
        %532 = vmatpush1.msra.mxu0 %v499
        %533 = vmatprep.subr.mxu0 0.0
        %534 = vmatpush1.msra.mxu0 %v500
        %535 = vmatprep.subr.mxu0 0.0
        %536 = vmatpush1.msra.mxu0 %v501
        %537 = vmatprep.subr.mxu0 0.0
        %538 = vmatpush1.msra.mxu0 %v502
        %539 = vmatprep.subr.mxu0 0.0
        %540 = vmatpush1.msra.mxu0 %v503
        %541 = vmatprep.subr.mxu0 0.0
        %542 = vmatpush1.msra.mxu0 %v504
        %543 = vmatprep.subr.mxu0 0.0
        %544 = vmatpush1.msra.mxu0 %v505
        %545 = vmatprep.subr.mxu0 0.0
        %546 = vmatpush1.msra.mxu0 %v506
        %547 = vmatprep.subr.mxu0 0.0
        %548 = vmatpush1.msra.mxu0 %v507
        %549 = vmatprep.subr.mxu0 0.0
        %550 = vmatpush1.msra.mxu0 %v508
        %551 = vmatprep.subr.mxu0 0.0
        %552 = vmatpush1.msra.mxu0 %v509
        %553 = vmatprep.subr.mxu0 0.0
        %554 = vmatpush1.msra.mxu0 %v510
        %555 = vmatprep.subr.mxu0 0.0
        %556 = vmatpush1.msra.mxu0 %v511
        %557 = vmatprep.subr.mxu0 0.0
        %558 = vmatpush1.msra.mxu0 %v512
        %559 = vmatprep.subr.mxu0 0.0
        %560 = vmatpush1.msra.mxu0 %v513
        %561 = vmatprep.subr.mxu0 0.0
        %562 = vmatpush1.msra.mxu0 %v514
        %563 = vmatprep.subr.mxu0 0.0
        %564 = vmatpush1.msra.mxu0 %v515
        %565 = vmatprep.subr.mxu0 0.0
        %566 = vmatpush1.msra.mxu0 %v516
        %567 = vmatprep.subr.mxu0 0.0
        %568 = vmatpush1.msra.mxu0 %v517
        %569 = vmatprep.subr.mxu0 0.0
        %570 = vmatpush1.msra.mxu0 %v518
        %571 = vmatprep.subr.mxu0 0.0
        %572 = vmatpush1.msra.mxu0 %v519
        %573 = vmatprep.subr.mxu0 0.0
        %574 = vmatpush1.msra.mxu0 %v520
        %575 = vmatprep.subr.mxu0 0.0
        %576 = vmatpush1.msra.mxu0 %v521
        %577 = vmatprep.subr.mxu0 0.0
        %578 = vmatpush1.msra.mxu0 %v522
        %579 = vmatprep.subr.mxu0 0.0
        %580 = vmatpush1.msra.mxu0 %v523
        %581 = vmatprep.subr.mxu0 0.0
        %582 = vmatpush1.msra.mxu0 %v524
        %583 = vmatprep.subr.mxu0 0.0
        %584 = vmatpush1.msra.mxu0 %v525
        %585 = vmatprep.subr.mxu0 0.0
        %586 = vmatpush1.msra.mxu0 %v526
        %587 = vmatprep.subr.mxu0 0.0
        %588 = vmatpush1.msra.mxu0 %v527
        %589 = vmatprep.subr.mxu0 0.0
        %590 = vmatpush1.msra.mxu0 %v528
        %591 = vmatprep.subr.mxu0 0.0
        %592 = vmatpush1.msra.mxu0 %v529
        %593 = vmatprep.subr.mxu0 0.0
        %594 = vmatpush1.msra.mxu0 %v530
        %595 = vmatprep.mubr.f32.mxu0 1.0
        %596 = vmatmul.mubr.f32.gmra.mrb[0].mxu0 1.0
        %v597 = vpop.f32.mrb[0].mxu0
        %v598 = vadd.f32 0.0, %v597
        %v599 = vpop.f32.mrb[0].mxu0
        %600 = vdwg.mxu0
        %v602 = vrot.slane %v598, 7
        %v604 = vsel %vm423, %v496, %v602
        %v605 = vadd.f32 %v428, %v604
        %606 = vst.msk [vmem:[#allocation4] sm:$0x3] %vm426, %v605
        // Predicated region
        $region33: #{tpu_custom_call.1} parent=27 // pred_check
          %p607 = pneg %p82
        $region34: #{tpu_custom_call.1} parent=27 // pred_check_branch
          %609 = sbr.rel (%p607) target = $region36
        $region35: #{tpu_custom_call.1} parent=27 // pred_region
          %s611 = ssub.s32 32, 32
          %612 = vsyncadd [#allocation3], %s611
          %s614 = sshll.u32 [#allocation2], 4
          %s615 = int_to_ptr.vmem [resolvable:$true] %s614
          %617 = dma.vmem_to_hbm [thread:$0]  %s615, 32, %s2, [#allocation3]
        $region36: #{tpu_custom_call.1} parent=27 // pred_fallthru
          _
        // Predicated region
        $region37: #{tpu_custom_call.1} parent=27 // pred_check
          %p618 = pneg %p103
        $region38: #{tpu_custom_call.1} parent=27 // pred_check_branch
          %620 = sbr.rel (%p618) target = $region40
        $region39: #{tpu_custom_call.1} parent=27 // pred_region
          %s622 = ssub.s32 32, 32
          %623 = vsyncadd [#allocation5], %s622
          %s625 = sshll.u32 [#allocation4], 4
          %s626 = int_to_ptr.vmem [resolvable:$true] %s625
          %628 = dma.vmem_to_hbm [thread:$0]  %s626, 32, %s3, [#allocation5]
        $region40: #{tpu_custom_call.1} parent=27 // pred_fallthru
          _
        // Predicated region
        $region41: #{tpu_custom_call.1} parent=27 // pred_check
          %p629 = pneg %p82
        $region42: #{tpu_custom_call.1} parent=27 // pred_check_branch
          %631 = sbr.rel (%p629) target = $region44
        $region43: #{tpu_custom_call.1} parent=27 // pred_region
          %632 = dma.done [#allocation3], 32
        $region44: #{tpu_custom_call.1} parent=27 // pred_fallthru
          _
        // Predicated region
        $region45: #{tpu_custom_call.1} parent=27 // pred_check
          %p633 = pneg %p103
        $region46: #{tpu_custom_call.1} parent=27 // pred_check_branch
          %635 = sbr.rel (%p633) target = $region48
        $region47: #{tpu_custom_call.1} parent=27 // pred_region
          %636 = dma.done [#allocation5], 32
        $region48: #{tpu_custom_call.1} parent=27 // pred_fallthru
          _
      $region28: #{tpu_custom_call.1} parent=5 // pred_fallthru
        _
      %p637 = scmp.le.s32.totalorder 2, %s12
      // Predicated region
      $region49: #{tpu_custom_call.1} parent=5 // pred_check
        %p638 = pneg %p637
      $region50: #{tpu_custom_call.1} parent=5 // pred_check_branch
        %640 = sbr.rel (%p638) target = $region52
      $region51: #{tpu_custom_call.1} parent=5 // pred_region
        %s641 = ssub.s32 %s12, 2
      $region52: #{tpu_custom_call.1} parent=5 // pred_fallthru
        _
    $region6: #{tpu_custom_call.1} parent=1 // loop_footer
      %s16 = sadd.s32 1, %s12
    $region7: #{tpu_custom_call.1} parent=1 // loop_footer_branch
      %11 = sbr.rel target = $region3
    $region8: #{tpu_custom_call.1} parent=1 // loop_exit
      _
    %642 = vsyncpa [#allocation3], 1
    %s643 = scalar_lea.sflag [#allocation3], 1
    %644 = vsyncpa %s643, 1
    %645 = vsyncpa [#allocation5], 1

</llo_original>
